<compile_context>
chip_gen: v6e
topology: v6e:2x2x1
jax: 0.10.0
libtpu: 0.0.40
codegen_flags: <defaults>
</compile_context>

<pallas_src>
import math

import jax
import jax.numpy as jnp
from jax.experimental import pallas as pl
from jax.experimental.pallas import tpu as pltpu


def _logit(p):
    return math.log(p / (1.0 - p))


class NoOpPallas:
    """JAX counterpart of the PyTorch NoOp module."""

    def __init__(self,
                 initial_magnitude=(2.0, 2.0),
                 initial_probability=(0.9999999, 0.9999999),
                 temperature=0.1):
        # Non-learnable buffers, kept only for shape fidelity with the
        # PyTorch module; NoOp.forward never reads them.
        self.magnitude = jnp.asarray(initial_magnitude, dtype=jnp.float32)
        self.probability = jnp.asarray(
            [_logit(p) for p in initial_probability], dtype=jnp.float32)
        assert temperature > 0
        self.temperature = temperature

    def __call__(self, x, label):
        # NoOp.forward ignores `label` and returns the input unchanged.
        # Zero-cost path: no Pallas launch, no HBM read/write.
        return x


# ----------------------------------------------------------------------------
# Optional materialized identity copy: single direct HBM -> HBM DMA.
# ----------------------------------------------------------------------------

def _dma_copy_kernel(x_hbm_ref, o_hbm_ref, sem):
    # One whole-array DMA: no VMEM staging, no vreg traffic, no grid overhead.
    copy = pltpu.make_async_copy(x_hbm_ref, o_hbm_ref, sem)
    copy.start()
    copy.wait()


def identity_copy_pallas(x):
    """Identity that returns a freshly materialized copy of `x`.

    Implemented as a single HBM->HBM DMA inside one Pallas invocation
    (grid=()), which is the HBM-bandwidth-optimal way to copy on TPU.
    The input is NOT aliased/donated, so `x` stays valid and the result is
    guaranteed to be a distinct buffer.
    """
    nbytes = x.size * x.dtype.itemsize
    return pl.pallas_call(
        _dma_copy_kernel,
        out_shape=jax.ShapeDtypeStruct(x.shape, x.dtype),
        in_specs=[pl.BlockSpec(memory_space=pl.ANY)],
        out_specs=pl.BlockSpec(memory_space=pl.ANY),
        scratch_shapes=[pltpu.SemaphoreType.DMA],
        cost_estimate=pl.CostEstimate(
            flops=0, transcendentals=0, bytes_accessed=2 * nbytes),
    )(x)


if __name__ == "__main__":
    key = jax.random.PRNGKey(0)
    k_x, k_lbl = jax.random.split(key)

    # Small shapes consistent with the (BS, C, L) convention of _Operation.
    BS, C, L = 2, 4, 128
    x = jax.random.normal(k_x, (BS, C, L), dtype=jnp.float32)
    label = jax.random.randint(k_lbl, (BS,), 0, 2, dtype=jnp.int32)

    # 1) The real NoOp: returns its input, zero cost.
    op = NoOpPallas()
    out = op(x, label)
    assert out is x

    # 2) The optional materialized-copy kernel (single HBM->HBM DMA).
    out_copy = identity_copy_pallas(x)
    out_copy = jax.block_until_ready(out_copy)

    assert out_copy.shape == x.shape and out_copy.dtype == x.dtype
    assert jnp.array_equal(out_copy, x)
    print("KERNEL_OK")
</pallas_src>

<mosaic_0001>
module attributes {stable_mosaic.version = 11 : i64} {
  func.func @_dma_copy_kernel(%arg0: memref<2x4x128xf32, #tpu.memory_space<any>>, %arg1: memref<2x4x128xf32, #tpu.memory_space<any>>, %arg2: memref<!tpu.dma_semaphore, #tpu.memory_space<semaphore_mem>>) attributes {dimension_semantics = [], scalar_prefetch = 0 : i64, scratch_operands = 1 : i64, tpu.core_type = #tpu.core_type<tc>} {
    tpu.enqueue_dma source(%arg0 : memref<2x4x128xf32, #tpu.memory_space<any>>) target(%arg1 : memref<2x4x128xf32, #tpu.memory_space<any>>) target_semaphore(%arg2 : memref<!tpu.dma_semaphore, #tpu.memory_space<semaphore_mem>>)
    tpu.wait_dma2 semaphore(%arg2 : memref<!tpu.dma_semaphore, #tpu.memory_space<semaphore_mem>>) src(%arg0 : memref<2x4x128xf32, #tpu.memory_space<any>>) dst(%arg1 : memref<2x4x128xf32, #tpu.memory_space<any>>)
    return
  }
}

</mosaic_0001>

<llo_original>
// kernel: tpu_custom_call.1
$region0: #{tpu_custom_call.1}
  #allocation0 [shape = 'u32[]', space=smem, size = 0x4, offset = 0x4, fixed_abs, tag = 'smem constant byte address 0x4 - core index']
  #allocation1 [shape = 'u32[144,128]{1,0:T(1,128)}', space=vmem, size = 0x12000, scoped, tag = 'internal scratch']
  #allocation2 [shape = 's32[1]{0}', space=sflag, size = 0x4, scoped, tag = 'scratch operand']
  #allocation3 [shape = 's32[]', space=sflag, size = 0x4, offset = 0, fixed_abs, tag = 'sflag constant byte address 0x0 - dummy sync flag']
  #allocation4 [shape = 'u32[0]{0}', space=smem, size = 0, offset = 0, fixed_abs, tag = 'smem constant byte address 0x0 - null']
  %s0 = inlined_call_operand.hbm [shape: f32[2,4,128], index: 0, kind: input, shape index: {}]
  %s1 = inlined_call_operand.hbm [shape: f32[2,4,128], index: 1, kind: output, shape index: {}]
  %s2 = sld [smem:[#allocation0]]
  $region2: #{tpu_custom_call.1} parent=0
    _
  %s4 = ssub.s32 1, %s2
  %s5 = scalar_select 0, %s4, %s2
  %s7 = sshll.u32 1, 14
  %s8 = sxor.u32 4294967295, %s7
  %12 = dma.general %s0, 128, %s1, [#allocation2], 131072, [#allocation4], 0, 0
  %s13 = smul.u32 2, 4
  %s14 = smul.u32 %s13, 1
  %s15 = sshll.u32 %s14, 4
  %16 = dma.done [#allocation2], %s15
  %17 = vsyncmov [#allocation2]
  %s18 = vpop.sfrf %17
  %p19 = scmp.eq.s32.totalorder %s18, 0
  %p20 = pneg %p19
  %22 = shalt.err (%p20)

</llo_original>
